<compile_context>
chip_gen: v5e
topology: v5e:2x2
jax: 0.10.0
libtpu: 0.0.40
codegen_flags: <defaults>
</compile_context>

<pallas_src>
import numpy as np

import jax
import jax.numpy as jnp
from jax.experimental import pallas as pl
from jax.experimental.pallas import tpu as pltpu


# ----------------------------------------------------------------------------
# Geometry
# ----------------------------------------------------------------------------
IMG_C, IMG_H, IMG_W = 4, 5, 5
FIMG_C, FIMG_H, FIMG_W = 4, 7, 7
IMG_SIZE = IMG_C * IMG_H * IMG_W            # 100
FIMG_SIZE = FIMG_C * FIMG_H * FIMG_W        # 196
HEALTH_SIZE = 1
PANTRY_SIZE = 16
SHELF_SIZE = 8
SIZES = [IMG_SIZE, FIMG_SIZE, HEALTH_SIZE, PANTRY_SIZE, SHELF_SIZE]
OBS_DIM = sum(SIZES)                        # 321

IMG_OFF = 0
FIMG_OFF = IMG_OFF + IMG_SIZE               # 100
HEALTH_OFF = FIMG_OFF + FIMG_SIZE           # 296
PANTRY_OFF = HEALTH_OFF + HEALTH_SIZE       # 297
SHELF_OFF = PANTRY_OFF + PANTRY_SIZE        # 313

CONV_OC, CONV_K = 8, 3
IMG_OH, IMG_OW = IMG_H - CONV_K + 1, IMG_W - CONV_K + 1        # 3, 3
FIMG_OH, FIMG_OW = FIMG_H - CONV_K + 1, FIMG_W - CONV_K + 1    # 5, 5
IMG_CONV_FLAT = CONV_OC * IMG_OH * IMG_OW                      # 72
FIMG_CONV_FLAT = CONV_OC * FIMG_OH * FIMG_OW                   # 200

IMG_FEAT = 32
FIMG_FEAT = 32
INV_ITEM_FEAT = 16
INV_FEAT = 32
FINAL_HIDDEN = 32
ACTION_DIM = 8


def _round_up(x, m):
    return (x + m - 1) // m * m


# Lane-padded fused layer widths (multiples of 128).
N1 = IMG_CONV_FLAT + FIMG_CONV_FLAT + 2 * INV_ITEM_FEAT        # 304
N1P = _round_up(N1, 128)                                       # 384
N2 = IMG_FEAT + FIMG_FEAT + INV_FEAT                           # 96
N2P = 128
N3P = 128
N4P = 128                                                      # padded logits

# Stage-1 output column offsets.
C_IMG_OFF = 0
C_FIMG_OFF = IMG_CONV_FLAT                                     # 72
P_FEAT_OFF = C_FIMG_OFF + FIMG_CONV_FLAT                       # 272
S_FEAT_OFF = P_FEAT_OFF + INV_ITEM_FEAT                        # 288
# Stage-2 output column offsets.
IMG_FEAT_OFF = 0
FIMG_FEAT_OFF = IMG_FEAT                                       # 32
INV_FEAT_OFF = FIMG_FEAT_OFF + FIMG_FEAT                       # 64

NEG_BIG = -1e30   # softmax pad-lane bias => exp underflows to exactly 0


# ----------------------------------------------------------------------------
# Fused Pallas kernel: whole forward for one batch tile
# ----------------------------------------------------------------------------
def _fused_forward_kernel(x_ref, health_ref, w1_ref, b1_ref,
                          w2_ref, w2h_ref, b2_ref,
                          w3_ref, b3_ref, w4_ref, b4_ref, o_ref):
    # Stage 1: conv-as-dense (img & full_img) + pantry/shelf encoders, block-diag.
    x = x_ref[...]
    h1 = jnp.maximum(
        jnp.dot(x, w1_ref[...], preferred_element_type=jnp.float32) + b1_ref[...],
        0.0)

    # Stage 2: img_fc / full_img_fc / inventory joint FC (health is a raw,
    # un-ReLU'd passthrough handled as a rank-1 broadcast term).
    health = health_ref[...]                       # (TM, 1)
    h2 = jnp.maximum(
        jnp.dot(h1, w2_ref[...], preferred_element_type=jnp.float32)
        + health * w2h_ref[...] + b2_ref[...],
        0.0)

    # Stage 3: final hidden layer.
    h3 = jnp.maximum(
        jnp.dot(h2, w3_ref[...], preferred_element_type=jnp.float32) + b3_ref[...],
        0.0)

    # Stage 4: logits + softmax over the 128 padded lanes (pads contribute 0).
    z = jnp.dot(h3, w4_ref[...], preferred_element_type=jnp.float32) + b4_ref[...]
    z = z - jnp.max(z, axis=-1, keepdims=True)
    e = jnp.exp(z)
    s = jnp.sum(e, axis=-1, keepdims=True)
    r = pl.reciprocal(s, approx=True)
    r = r * (2.0 - s * r)                          # one Newton step, VPU-cheap
    o_ref[...] = e * r


def flat_food_network_forward(fused, obs):
    """Forward pass of FlatFoodNetworkMedium (returns (B, ACTION_DIM) probs)."""
    if obs.ndim < 2:
        obs = obs[None, :]
    assert obs.shape[1] == OBS_DIM, "not all of obs used"
    obs = obs.astype(jnp.float32)
    b = obs.shape[0]

    tm = min(_round_up(b, 8), 512)                 # batch tile (sublane aligned)
    bp = _round_up(b, tm)
    if bp != b:
        obs = jnp.pad(obs, ((0, bp - b), (0, 0)))
    health = obs[:, HEALTH_OFF:HEALTH_OFF + HEALTH_SIZE]   # (bp, 1) glue slice

    weight_elems = (OBS_DIM * N1P + N1P * N2P + N2P * N3P + N3P * N4P
                    + N1P + 3 * N2P + N3P + N4P)
    cost = pl.CostEstimate(
        flops=2 * bp * (OBS_DIM * N1P + N1P * N2P + N2P * N3P + N3P * N4P),
        transcendentals=bp * (N4P + 1),
        bytes_accessed=4 * (bp * (OBS_DIM + 1 + N4P) + weight_elems),
    )

    def _full(a):
        return pl.BlockSpec(a.shape, lambda i: (0, 0))

    out = pl.pallas_call(
        _fused_forward_kernel,
        out_shape=jax.ShapeDtypeStruct((bp, N4P), jnp.float32),
        grid=(bp // tm,),
        in_specs=[
            pl.BlockSpec((tm, OBS_DIM), lambda i: (i, 0)),
            pl.BlockSpec((tm, HEALTH_SIZE), lambda i: (i, 0)),
            _full(fused["w1"]), _full(fused["b1"]),
            _full(fused["w2"]), _full(fused["w2h"]), _full(fused["b2"]),
            _full(fused["w3"]), _full(fused["b3"]),
            _full(fused["w4"]), _full(fused["b4"]),
        ],
        out_specs=pl.BlockSpec((tm, N4P), lambda i: (i, 0)),
        compiler_params=pltpu.CompilerParams(
            dimension_semantics=("parallel",)),
        cost_estimate=cost,
    )(obs, health,
      fused["w1"], fused["b1"],
      fused["w2"], fused["w2h"], fused["b2"],
      fused["w3"], fused["b3"],
      fused["w4"], fused["b4"])

    return out[:b, :ACTION_DIM]


# TODO(synk): get_action's Categorical sampling stays host-side (no Pallas
# equivalent needed; it is not part of the forward hot path).


# ----------------------------------------------------------------------------
# Parameters (synthetic, deterministic) and host-side weight fusion
# ----------------------------------------------------------------------------
def _init(key, shape, scale=0.1):
    return scale * jax.random.normal(key, shape, dtype=jnp.float32)


def init_params(seed=1):
    keys = jax.random.split(jax.random.PRNGKey(seed), 18)
    return {
        "img_conv_w": _init(keys[0], (CONV_OC, IMG_C, CONV_K, CONV_K)),
        "img_conv_b": _init(keys[1], (CONV_OC,)),
        "img_fc_w": _init(keys[2], (IMG_CONV_FLAT, IMG_FEAT)),
        "img_fc_b": _init(keys[3], (IMG_FEAT,)),
        "fimg_conv_w": _init(keys[4], (CONV_OC, FIMG_C, CONV_K, CONV_K)),
        "fimg_conv_b": _init(keys[5], (CONV_OC,)),
        "fimg_fc_w": _init(keys[6], (FIMG_CONV_FLAT, FIMG_FEAT)),
        "fimg_fc_b": _init(keys[7], (FIMG_FEAT,)),
        "pantry_w": _init(keys[8], (PANTRY_SIZE, INV_ITEM_FEAT)),
        "pantry_b": _init(keys[9], (INV_ITEM_FEAT,)),
        "shelf_w": _init(keys[10], (SHELF_SIZE, INV_ITEM_FEAT)),
        "shelf_b": _init(keys[11], (INV_ITEM_FEAT,)),
        "inv_fc_w": _init(keys[12], (2 * INV_ITEM_FEAT + HEALTH_SIZE, INV_FEAT)),
        "inv_fc_b": _init(keys[13], (INV_FEAT,)),
        "final_w1": _init(keys[14], (IMG_FEAT + FIMG_FEAT + INV_FEAT, FINAL_HIDDEN)),
        "final_b1": _init(keys[15], (FINAL_HIDDEN,)),
        "final_w2": _init(keys[16], (FINAL_HIDDEN, ACTION_DIM)),
        "final_b2": _init(keys[17], (ACTION_DIM,)),
    }


def _conv_to_dense(w_oihw, bias, H, W):
    """Unfold a stride-1 VALID Conv2d (PyTorch NCHW/OIHW) into a dense matmul.

    conv(x).reshape(B, -1) == x.reshape(B, C*H*W) @ Wd + bd, preserving the
    PyTorch (B, OC*OH*OW) channel-major flatten order.
    """
    w = np.asarray(w_oihw, np.float32)
    OC, IC, KH, KW = w.shape
    OH, OW = H - KH + 1, W - KW + 1
    Wd = np.zeros((IC * H * W, OC * OH * OW), np.float32)
    for oh in range(OH):
        for ow in range(OW):
            col0 = oh * OW + ow
            for kh in range(KH):
                for kw in range(KW):
                    for ic in range(IC):
                        row = ic * H * W + (oh + kh) * W + (ow + kw)
                        Wd[row, col0::OH * OW] = w[:, ic, kh, kw]
    bd = np.repeat(np.asarray(bias, np.float32), OH * OW)
    return Wd, bd


def build_fused_params(p):
    """Fold all layers into 4 lane-padded block-diagonal matmul weights."""
    # Stage 1
    w1 = np.zeros((OBS_DIM, N1P), np.float32)
    b1 = np.zeros((1, N1P), np.float32)
    wc, bc = _conv_to_dense(p["img_conv_w"], p["img_conv_b"], IMG_H, IMG_W)
    w1[IMG_OFF:IMG_OFF + IMG_SIZE, C_IMG_OFF:C_IMG_OFF + IMG_CONV_FLAT] = wc
    b1[0, C_IMG_OFF:C_IMG_OFF + IMG_CONV_FLAT] = bc
    wc, bc = _conv_to_dense(p["fimg_conv_w"], p["fimg_conv_b"], FIMG_H, FIMG_W)
    w1[FIMG_OFF:FIMG_OFF + FIMG_SIZE, C_FIMG_OFF:C_FIMG_OFF + FIMG_CONV_FLAT] = wc
    b1[0, C_FIMG_OFF:C_FIMG_OFF + FIMG_CONV_FLAT] = bc
    w1[PANTRY_OFF:PANTRY_OFF + PANTRY_SIZE,
       P_FEAT_OFF:P_FEAT_OFF + INV_ITEM_FEAT] = np.asarray(p["pantry_w"])
    b1[0, P_FEAT_OFF:P_FEAT_OFF + INV_ITEM_FEAT] = np.asarray(p["pantry_b"])
    w1[SHELF_OFF:SHELF_OFF + SHELF_SIZE,
       S_FEAT_OFF:S_FEAT_OFF + INV_ITEM_FEAT] = np.asarray(p["shelf_w"])
    b1[0, S_FEAT_OFF:S_FEAT_OFF + INV_ITEM_FEAT] = np.asarray(p["shelf_b"])

    # Stage 2 (health passed separately as a rank-1 broadcast row)
    w2 = np.zeros((N1P, N2P), np.float32)
    w2h = np.zeros((1, N2P), np.float32)
    b2 = np.zeros((1, N2P), np.float32)
    w2[C_IMG_OFF:C_IMG_OFF + IMG_CONV_FLAT,
       IMG_FEAT_OFF:IMG_FEAT_OFF + IMG_FEAT] = np.asarray(p["img_fc_w"])
    b2[0, IMG_FEAT_OFF:IMG_FEAT_OFF + IMG_FEAT] = np.asarray(p["img_fc_b"])
    w2[C_FIMG_OFF:C_FIMG_OFF + FIMG_CONV_FLAT,
       FIMG_FEAT_OFF:FIMG_FEAT_OFF + FIMG_FEAT] = np.asarray(p["fimg_fc_w"])
    b2[0, FIMG_FEAT_OFF:FIMG_FEAT_OFF + FIMG_FEAT] = np.asarray(p["fimg_fc_b"])
    inv_w = np.asarray(p["inv_fc_w"])
    w2[P_FEAT_OFF:P_FEAT_OFF + INV_ITEM_FEAT,
       INV_FEAT_OFF:INV_FEAT_OFF + INV_FEAT] = inv_w[:INV_ITEM_FEAT]
    w2[S_FEAT_OFF:S_FEAT_OFF + INV_ITEM_FEAT,
       INV_FEAT_OFF:INV_FEAT_OFF + INV_FEAT] = inv_w[INV_ITEM_FEAT:2 * INV_ITEM_FEAT]
    w2h[0, INV_FEAT_OFF:INV_FEAT_OFF + INV_FEAT] = inv_w[2 * INV_ITEM_FEAT]
    b2[0, INV_FEAT_OFF:INV_FEAT_OFF + INV_FEAT] = np.asarray(p["inv_fc_b"])

    # Stage 3
    w3 = np.zeros((N2P, N3P), np.float32)
    b3 = np.zeros((1, N3P), np.float32)
    w3[:N2, :FINAL_HIDDEN] = np.asarray(p["final_w1"])
    b3[0, :FINAL_HIDDEN] = np.asarray(p["final_b1"])

    # Stage 4 (pad logits get -1e30 bias so softmax ignores them)
    w4 = np.zeros((N3P, N4P), np.float32)
    b4 = np.full((1, N4P), NEG_BIG, np.float32)
    w4[:FINAL_HIDDEN, :ACTION_DIM] = np.asarray(p["final_w2"])
    b4[0, :ACTION_DIM] = np.asarray(p["final_b2"])

    host = dict(w1=w1, b1=b1, w2=w2, w2h=w2h, b2=b2, w3=w3, b3=b3, w4=w4, b4=b4)
    return {k: jnp.asarray(v) for k, v in host.items()}


# ----------------------------------------------------------------------------
# Pure-JAX reference (mirrors the PyTorch layer structure) for validation
# ----------------------------------------------------------------------------
def reference_forward(p, obs):
    if obs.ndim < 2:
        obs = obs[None, :]
    img = obs[:, IMG_OFF:IMG_OFF + IMG_SIZE]
    fimg = obs[:, FIMG_OFF:FIMG_OFF + FIMG_SIZE]
    health = obs[:, HEALTH_OFF:HEALTH_OFF + HEALTH_SIZE]
    pantry = obs[:, PANTRY_OFF:PANTRY_OFF + PANTRY_SIZE]
    shelf = obs[:, SHELF_OFF:SHELF_OFF + SHELF_SIZE]

    def conv_branch(x_flat, C, H, W, wc, bc, wf, bf):
        x = x_flat.reshape(-1, C, H, W)
        y = jax.lax.conv_general_dilated(
            x, wc, window_strides=(1, 1), padding="VALID",
            dimension_numbers=("NCHW", "OIHW", "NCHW"))
        y = jnp.maximum(y + bc.reshape(1, -1, 1, 1), 0.0).reshape(x.shape[0], -1)
        return jnp.maximum(y @ wf + bf, 0.0)

    x_img = conv_branch(img, IMG_C, IMG_H, IMG_W, p["img_conv_w"],
                        p["img_conv_b"], p["img_fc_w"], p["img_fc_b"])
    x_fimg = conv_branch(fimg, FIMG_C, FIMG_H, FIMG_W, p["fimg_conv_w"],
                         p["fimg_conv_b"], p["fimg_fc_w"], p["fimg_fc_b"])
    pf = jnp.maximum(pantry @ p["pantry_w"] + p["pantry_b"], 0.0)
    sf = jnp.maximum(shelf @ p["shelf_w"] + p["shelf_b"], 0.0)
    x_inv = jnp.maximum(
        jnp.concatenate([pf, sf, health], axis=1) @ p["inv_fc_w"] + p["inv_fc_b"], 0.0)
    h = jnp.maximum(
        jnp.concatenate([x_img, x_fimg, x_inv], axis=1) @ p["final_w1"] + p["final_b1"], 0.0)
    return jax.nn.softmax(h @ p["final_w2"] + p["final_b2"], axis=-1)


# ----------------------------------------------------------------------------
if __name__ == "__main__":
    params = init_params(seed=1)
    fused = build_fused_params(params)

    obs = jax.random.normal(jax.random.PRNGKey(0), (2, OBS_DIM), dtype=jnp.float32)

    fwd = jax.jit(flat_food_network_forward)
    dist_vec = jax.block_until_ready(fwd(fused, obs))

    assert dist_vec.shape == (2, ACTION_DIM)
    # softmax rows sum to 1 (approx-reciprocal + Newton refinement keeps this tight)
    assert bool(jnp.allclose(jnp.sum(dist_vec, axis=-1), 1.0, atol=1e-3))
    # matches the plain-JAX / PyTorch-semantics reference
    ref = reference_forward(params, obs)
    assert bool(jnp.allclose(dist_vec, ref, atol=2e-3))
    print("KERNEL_OK")
</pallas_src>

<mosaic_0001>
module attributes {stable_mosaic.version = 11 : i64} {
  func.func @_fused_forward_kernel(%arg0: i32, %arg1: memref<8x321xf32, #tpu.memory_space<vmem>>, %arg2: memref<8x1xf32, #tpu.memory_space<vmem>>, %arg3: memref<321x384xf32, #tpu.memory_space<vmem>>, %arg4: memref<1x384xf32, #tpu.memory_space<vmem>>, %arg5: memref<384x128xf32, #tpu.memory_space<vmem>>, %arg6: memref<1x128xf32, #tpu.memory_space<vmem>>, %arg7: memref<1x128xf32, #tpu.memory_space<vmem>>, %arg8: memref<128x128xf32, #tpu.memory_space<vmem>>, %arg9: memref<1x128xf32, #tpu.memory_space<vmem>>, %arg10: memref<128x128xf32, #tpu.memory_space<vmem>>, %arg11: memref<1x128xf32, #tpu.memory_space<vmem>>, %arg12: memref<8x128xf32, #tpu.memory_space<vmem>>) attributes {dimension_semantics = [#tpu.dimension_semantics<parallel>], iteration_bounds = array<i64: 1>, scalar_prefetch = 0 : i64, scratch_operands = 0 : i64, tpu.core_type = #tpu.core_type<tc>, window_params = [{transform_indices = @transform_0, window_bounds = array<i64: 8, 321>}, {transform_indices = @transform_1, window_bounds = array<i64: 8, 1>}, {pipeline_mode = #tpu.pipeline_mode<synchronous>, transform_indices = @transform_2, window_bounds = array<i64: 321, 384>}, {pipeline_mode = #tpu.pipeline_mode<synchronous>, transform_indices = @transform_3, window_bounds = array<i64: 1, 384>}, {pipeline_mode = #tpu.pipeline_mode<synchronous>, transform_indices = @transform_4, window_bounds = array<i64: 384, 128>}, {pipeline_mode = #tpu.pipeline_mode<synchronous>, transform_indices = @transform_5, window_bounds = array<i64: 1, 128>}, {pipeline_mode = #tpu.pipeline_mode<synchronous>, transform_indices = @transform_6, window_bounds = array<i64: 1, 128>}, {pipeline_mode = #tpu.pipeline_mode<synchronous>, transform_indices = @transform_7, window_bounds = array<i64: 128, 128>}, {pipeline_mode = #tpu.pipeline_mode<synchronous>, transform_indices = @transform_8, window_bounds = array<i64: 1, 128>}, {pipeline_mode = #tpu.pipeline_mode<synchronous>, transform_indices = @transform_9, window_bounds = array<i64: 128, 128>}, {pipeline_mode = #tpu.pipeline_mode<synchronous>, transform_indices = @transform_10, window_bounds = array<i64: 1, 128>}, {transform_indices = @transform_11, window_bounds = array<i64: 8, 128>}]} {
    %c0 = arith.constant 0 : index
    %c0_0 = arith.constant 0 : index
    %0 = vector.load %arg1[%c0, %c0_0] : memref<8x321xf32, #tpu.memory_space<vmem>>, vector<8x321xf32>
    %c0_1 = arith.constant 0 : index
    %c0_2 = arith.constant 0 : index
    %1 = vector.load %arg3[%c0_1, %c0_2] : memref<321x384xf32, #tpu.memory_space<vmem>>, vector<321x384xf32>
    %cst = arith.constant dense<0.000000e+00> : vector<8x384xf32>
    %2 = tpu.matmul %0, %1, %cst {dimension_numbers = #tpu.dot_dimension_numbers<[1], [0], [0], [1], [0, 0, 1, 1], [], []>} : vector<8x321xf32>, vector<321x384xf32>, vector<8x384xf32> -> vector<8x384xf32>
    %c0_3 = arith.constant 0 : index
    %c0_4 = arith.constant 0 : index
    %3 = vector.load %arg4[%c0_3, %c0_4] : memref<1x384xf32, #tpu.memory_space<vmem>>, vector<1x384xf32>
    %4 = vector.broadcast %3 : vector<1x384xf32> to vector<8x384xf32>
    %5 = arith.addf %2, %4 : vector<8x384xf32>
    %cst_5 = arith.constant 0.000000e+00 : f32
    %6 = vector.broadcast %cst_5 : f32 to vector<8x384xf32>
    %7 = arith.maximumf %5, %6 : vector<8x384xf32>
    %c0_6 = arith.constant 0 : index
    %c0_7 = arith.constant 0 : index
    %8 = vector.load %arg2[%c0_6, %c0_7] : memref<8x1xf32, #tpu.memory_space<vmem>>, vector<8x1xf32>
    %c0_8 = arith.constant 0 : index
    %c0_9 = arith.constant 0 : index
    %9 = vector.load %arg5[%c0_8, %c0_9] : memref<384x128xf32, #tpu.memory_space<vmem>>, vector<384x128xf32>
    %cst_10 = arith.constant dense<0.000000e+00> : vector<8x128xf32>
    %10 = tpu.matmul %7, %9, %cst_10 {dimension_numbers = #tpu.dot_dimension_numbers<[1], [0], [0], [1], [0, 0, 1, 1], [], []>} : vector<8x384xf32>, vector<384x128xf32>, vector<8x128xf32> -> vector<8x128xf32>
    %c0_11 = arith.constant 0 : index
    %c0_12 = arith.constant 0 : index
    %11 = vector.load %arg6[%c0_11, %c0_12] : memref<1x128xf32, #tpu.memory_space<vmem>>, vector<1x128xf32>
    %12 = vector.broadcast %8 : vector<8x1xf32> to vector<8x128xf32>
    %13 = vector.broadcast %11 : vector<1x128xf32> to vector<8x128xf32>
    %14 = arith.mulf %12, %13 : vector<8x128xf32>
    %15 = arith.addf %10, %14 : vector<8x128xf32>
    %c0_13 = arith.constant 0 : index
    %c0_14 = arith.constant 0 : index
    %16 = vector.load %arg7[%c0_13, %c0_14] : memref<1x128xf32, #tpu.memory_space<vmem>>, vector<1x128xf32>
    %17 = vector.broadcast %16 : vector<1x128xf32> to vector<8x128xf32>
    %18 = arith.addf %15, %17 : vector<8x128xf32>
    %cst_15 = arith.constant 0.000000e+00 : f32
    %19 = vector.broadcast %cst_15 : f32 to vector<8x128xf32>
    %20 = arith.maximumf %18, %19 : vector<8x128xf32>
    %c0_16 = arith.constant 0 : index
    %c0_17 = arith.constant 0 : index
    %21 = vector.load %arg8[%c0_16, %c0_17] : memref<128x128xf32, #tpu.memory_space<vmem>>, vector<128x128xf32>
    %cst_18 = arith.constant dense<0.000000e+00> : vector<8x128xf32>
    %22 = tpu.matmul %20, %21, %cst_18 {dimension_numbers = #tpu.dot_dimension_numbers<[1], [0], [0], [1], [0, 0, 1, 1], [], []>} : vector<8x128xf32>, vector<128x128xf32>, vector<8x128xf32> -> vector<8x128xf32>
    %c0_19 = arith.constant 0 : index
    %c0_20 = arith.constant 0 : index
    %23 = vector.load %arg9[%c0_19, %c0_20] : memref<1x128xf32, #tpu.memory_space<vmem>>, vector<1x128xf32>
    %24 = vector.broadcast %23 : vector<1x128xf32> to vector<8x128xf32>
    %25 = arith.addf %22, %24 : vector<8x128xf32>
    %cst_21 = arith.constant 0.000000e+00 : f32
    %26 = vector.broadcast %cst_21 : f32 to vector<8x128xf32>
    %27 = arith.maximumf %25, %26 : vector<8x128xf32>
    %c0_22 = arith.constant 0 : index
    %c0_23 = arith.constant 0 : index
    %28 = vector.load %arg10[%c0_22, %c0_23] : memref<128x128xf32, #tpu.memory_space<vmem>>, vector<128x128xf32>
    %cst_24 = arith.constant dense<0.000000e+00> : vector<8x128xf32>
    %29 = tpu.matmul %27, %28, %cst_24 {dimension_numbers = #tpu.dot_dimension_numbers<[1], [0], [0], [1], [0, 0, 1, 1], [], []>} : vector<8x128xf32>, vector<128x128xf32>, vector<8x128xf32> -> vector<8x128xf32>
    %c0_25 = arith.constant 0 : index
    %c0_26 = arith.constant 0 : index
    %30 = vector.load %arg11[%c0_25, %c0_26] : memref<1x128xf32, #tpu.memory_space<vmem>>, vector<1x128xf32>
    %31 = vector.broadcast %30 : vector<1x128xf32> to vector<8x128xf32>
    %32 = arith.addf %29, %31 : vector<8x128xf32>
    %cst_27 = arith.constant dense<0xFF800000> : vector<8xf32>
    %33 = vector.multi_reduction <maximumf>, %32, %cst_27 [1] : vector<8x128xf32> to vector<8xf32>
    %34 = vector.shape_cast %33 : vector<8xf32> to vector<8x1xf32>
    %35 = vector.broadcast %34 : vector<8x1xf32> to vector<8x128xf32>
    %36 = arith.subf %32, %35 : vector<8x128xf32>
    %37 = math.exp %36 : vector<8x128xf32>
    %cst_28 = arith.constant dense<0.000000e+00> : vector<8xf32>
    %38 = vector.multi_reduction <add>, %37, %cst_28 [1] : vector<8x128xf32> to vector<8xf32>
    %39 = vector.shape_cast %38 : vector<8xf32> to vector<8x1xf32>
    %40 = tpu.reciprocal %39 {approx = true} : vector<8x1xf32> -> vector<8x1xf32>
    %41 = arith.mulf %39, %40 : vector<8x1xf32>
    %cst_29 = arith.constant 2.000000e+00 : f32
    %42 = vector.broadcast %cst_29 : f32 to vector<8x1xf32>
    %43 = arith.subf %42, %41 : vector<8x1xf32>
    %44 = arith.mulf %40, %43 : vector<8x1xf32>
    %45 = vector.broadcast %44 : vector<8x1xf32> to vector<8x128xf32>
    %46 = arith.mulf %37, %45 : vector<8x128xf32>
    %c0_30 = arith.constant 0 : index
    %c0_31 = arith.constant 0 : index
    %47 = vector.load %arg12[%c0_30, %c0_31] : memref<8x128xf32, #tpu.memory_space<vmem>>, vector<8x128xf32>
    tpu.vector_store %arg12[%c0_30, %c0_31], %46 {strides = array<i32>} : memref<8x128xf32, #tpu.memory_space<vmem>>, vector<8x128xf32>,
    return
  }
  func.func @transform_0(%arg0: i32) -> (i32, i32) {
    %c0_i32 = arith.constant 0 : i32
    %c0_i32_0 = arith.constant 0 : i32
    return %arg0, %c0_i32 : i32, i32
  }
  func.func @transform_1(%arg0: i32) -> (i32, i32) {
    %c0_i32 = arith.constant 0 : i32
    %c0_i32_0 = arith.constant 0 : i32
    return %arg0, %c0_i32 : i32, i32
  }
  func.func @transform_2(%arg0: i32) -> (i32, i32) {
    %c0_i32 = arith.constant 0 : i32
    %c0_i32_0 = arith.constant 0 : i32
    %c0_i32_1 = arith.constant 0 : i32
    return %c0_i32, %c0_i32_0 : i32, i32
  }
  func.func @transform_3(%arg0: i32) -> (i32, i32) {
    %c0_i32 = arith.constant 0 : i32
    %c0_i32_0 = arith.constant 0 : i32
    %c0_i32_1 = arith.constant 0 : i32
    return %c0_i32, %c0_i32_0 : i32, i32
  }
  func.func @transform_4(%arg0: i32) -> (i32, i32) {
    %c0_i32 = arith.constant 0 : i32
    %c0_i32_0 = arith.constant 0 : i32
    %c0_i32_1 = arith.constant 0 : i32
    return %c0_i32, %c0_i32_0 : i32, i32
  }
  func.func @transform_5(%arg0: i32) -> (i32, i32) {
    %c0_i32 = arith.constant 0 : i32
    %c0_i32_0 = arith.constant 0 : i32
    %c0_i32_1 = arith.constant 0 : i32
    return %c0_i32, %c0_i32_0 : i32, i32
  }
  func.func @transform_6(%arg0: i32) -> (i32, i32) {
    %c0_i32 = arith.constant 0 : i32
    %c0_i32_0 = arith.constant 0 : i32
    %c0_i32_1 = arith.constant 0 : i32
    return %c0_i32, %c0_i32_0 : i32, i32
  }
  func.func @transform_7(%arg0: i32) -> (i32, i32) {
    %c0_i32 = arith.constant 0 : i32
    %c0_i32_0 = arith.constant 0 : i32
    %c0_i32_1 = arith.constant 0 : i32
    return %c0_i32, %c0_i32_0 : i32, i32
  }
  func.func @transform_8(%arg0: i32) -> (i32, i32) {
    %c0_i32 = arith.constant 0 : i32
    %c0_i32_0 = arith.constant 0 : i32
    %c0_i32_1 = arith.constant 0 : i32
    return %c0_i32, %c0_i32_0 : i32, i32
  }
  func.func @transform_9(%arg0: i32) -> (i32, i32) {
    %c0_i32 = arith.constant 0 : i32
    %c0_i32_0 = arith.constant 0 : i32
    %c0_i32_1 = arith.constant 0 : i32
    return %c0_i32, %c0_i32_0 : i32, i32
  }
  func.func @transform_10(%arg0: i32) -> (i32, i32) {
    %c0_i32 = arith.constant 0 : i32
    %c0_i32_0 = arith.constant 0 : i32
    %c0_i32_1 = arith.constant 0 : i32
    return %c0_i32, %c0_i32_0 : i32, i32
  }
  func.func @transform_11(%arg0: i32) -> (i32, i32) {
    %c0_i32 = arith.constant 0 : i32
    %c0_i32_0 = arith.constant 0 : i32
    return %arg0, %c0_i32 : i32, i32
  }
}

</mosaic_0001>

<llo_original>
// kernel: flat_food_network_forward.1
$region0: #{flat_food_network_forward.1}
  #allocation0 [shape = 'u32[]', space=smem, size = 0x4, offset = 0x4, fixed_abs, tag = 'smem constant byte address 0x4 - core index']
  #allocation1 [shape = 'u32[72,128]{1,0:T(1,128)}', space=vmem, size = 0x9000, scoped, tag = 'internal scratch']
  %s0 = inlined_call_operand.vmem [shape: f32[8,321], index: 0, kind: input, shape index: {}]
  %s1 = inlined_call_operand.vmem [shape: f32[8,1], index: 1, kind: input, shape index: {}]
  %s2 = inlined_call_operand.hbm [shape: f32[321,384], index: 2, kind: input, shape index: {}]
  %s3 = inlined_call_operand.vmem [shape: f32[1,384], index: 3, kind: input, shape index: {}]
  %s4 = inlined_call_operand.hbm [shape: f32[384,128], index: 4, kind: input, shape index: {}]
  %s5 = inlined_call_operand.vmem [shape: f32[1,128], index: 5, kind: input, shape index: {}]
  %s6 = inlined_call_operand.vmem [shape: f32[1,128], index: 6, kind: input, shape index: {}]
  %s7 = inlined_call_operand.hbm [shape: f32[128,128], index: 7, kind: input, shape index: {}]
  %s8 = inlined_call_operand.vmem [shape: f32[1,128], index: 8, kind: input, shape index: {}]
  %s9 = inlined_call_operand.hbm [shape: f32[128,128], index: 9, kind: input, shape index: {}]
  %s10 = inlined_call_operand.vmem [shape: f32[1,128], index: 10, kind: input, shape index: {}]
  %s11 = inlined_call_operand.vmem [shape: f32[8,128], index: 11, kind: output, shape index: {}]
  %s12 = sld [smem:[#allocation0]]
  $region70: #{flat_food_network_forward.1} parent=0
    _
  %s14 = ssub.s32 1, %s12
  %s15 = scalar_select 0, %s14, %s12
  $region1: #{flat_food_network_forward.1} parent=0
    #allocation2 [shape = 'u8[503808]{0}', space=vmem, size = 0x7b000, scoped, tag = 'input window, operand 2, single buffered']
    #allocation3 [shape = 's32[1]{0}', space=sflag, size = 0x4, scoped, tag = 'scoped memory for flat_food_network_forward.1']
    #allocation4 [shape = 'u8[196608]{0}', space=vmem, size = 0x30000, scoped, tag = 'input window, operand 4, single buffered']
    #allocation5 [shape = 's32[1]{0}', space=sflag, size = 0x4, scoped, tag = 'scoped memory for flat_food_network_forward.1']
    #allocation6 [shape = 'u8[65536]{0}', space=vmem, size = 0x10000, scoped, tag = 'input window, operand 7, single buffered']
    #allocation7 [shape = 'u8[65536]{0}', space=vmem, size = 0x10000, scoped, tag = 'input window, operand 9, single buffered']
    #allocation8 [shape = 's32[1]{0}', space=sflag, size = 0x4, scoped, tag = 'scoped memory for flat_food_network_forward.1']
    %16 = vsyncpa [#allocation3], 0
    %17 = vsyncpa [#allocation5], 0
    %18 = vsyncpa [#allocation8], 0
    // Predicated region
    $region2: #{flat_food_network_forward.1} parent=1 // pred_check
      _
    $region3: #{flat_food_network_forward.1} parent=1 // pred_check_branch
      %20 = sbr.rel (0) target = $region5
    $region4: #{flat_food_network_forward.1} parent=1 // pred_region
      _
    $region5: #{flat_food_network_forward.1} parent=1 // pred_fallthru
      _
    // Predicated region
    $region6: #{flat_food_network_forward.1} parent=1 // pred_check
      _
    $region7: #{flat_food_network_forward.1} parent=1 // pred_check_branch
      %22 = sbr.rel (0) target = $region9
    $region8: #{flat_food_network_forward.1} parent=1 // pred_region
      _
    $region9: #{flat_food_network_forward.1} parent=1 // pred_fallthru
      _
    // Predicated region
    $region10: #{flat_food_network_forward.1} parent=1 // pred_check
      _
    $region11: #{flat_food_network_forward.1} parent=1 // pred_check_branch
      %24 = sbr.rel (0) target = $region13
    $region12: #{flat_food_network_forward.1} parent=1 // pred_region
      %26 = vsyncadd [#allocation3], 0
      %s27 = sshll.u32 %s2, 4
      %s28 = int_to_ptr.hbm [resolvable:$true] %s27
      %s29 = sshll.u32 [#allocation2], 4
      %s30 = int_to_ptr.vmem [resolvable:$true] %s29
      %35 = dma.hbm_to_vmem [thread:$0]  %s28, 15744, %s30, [#allocation3], 384, 384, 24
    $region13: #{flat_food_network_forward.1} parent=1 // pred_fallthru
      _
    // Predicated region
    $region14: #{flat_food_network_forward.1} parent=1 // pred_check
      _
    $region15: #{flat_food_network_forward.1} parent=1 // pred_check_branch
      %37 = sbr.rel (0) target = $region17
    $region16: #{flat_food_network_forward.1} parent=1 // pred_region
      _
    $region17: #{flat_food_network_forward.1} parent=1 // pred_fallthru
      _
    // Predicated region
    $region18: #{flat_food_network_forward.1} parent=1 // pred_check
      _
    $region19: #{flat_food_network_forward.1} parent=1 // pred_check_branch
      %39 = sbr.rel (0) target = $region21
    $region20: #{flat_food_network_forward.1} parent=1 // pred_region
      %41 = vsyncadd [#allocation5], 0
      %s42 = sshll.u32 %s4, 4
      %s43 = int_to_ptr.hbm [resolvable:$true] %s42
      %s44 = sshll.u32 [#allocation4], 4
      %s45 = int_to_ptr.vmem [resolvable:$true] %s44
      %50 = dma.hbm_to_vmem [thread:$0]  %s43, 6144, %s45, [#allocation5], 128, 128, 8
    $region21: #{flat_food_network_forward.1} parent=1 // pred_fallthru
      _
    // Predicated region
    $region22: #{flat_food_network_forward.1} parent=1 // pred_check
      _
    $region23: #{flat_food_network_forward.1} parent=1 // pred_check_branch
      %52 = sbr.rel (0) target = $region25
    $region24: #{flat_food_network_forward.1} parent=1 // pred_region
      _
    $region25: #{flat_food_network_forward.1} parent=1 // pred_fallthru
      _
    // Predicated region
    $region26: #{flat_food_network_forward.1} parent=1 // pred_check
      _
    $region27: #{flat_food_network_forward.1} parent=1 // pred_check_branch
      %54 = sbr.rel (0) target = $region29
    $region28: #{flat_food_network_forward.1} parent=1 // pred_region
      _
    $region29: #{flat_food_network_forward.1} parent=1 // pred_fallthru
      _
    // Predicated region
    $region30: #{flat_food_network_forward.1} parent=1 // pred_check
      _
    $region31: #{flat_food_network_forward.1} parent=1 // pred_check_branch
      %56 = sbr.rel (0) target = $region33
    $region32: #{flat_food_network_forward.1} parent=1 // pred_region
      %58 = vsyncadd [#allocation5], 0
      %s59 = sshll.u32 %s7, 4
      %s60 = int_to_ptr.hbm [resolvable:$true] %s59
      %s61 = sshll.u32 [#allocation6], 4
      %s62 = int_to_ptr.vmem [resolvable:$true] %s61
      %67 = dma.hbm_to_vmem [thread:$0]  %s60, 2048, %s62, [#allocation5], 128, 128, 8
    $region33: #{flat_food_network_forward.1} parent=1 // pred_fallthru
      _
    // Predicated region
    $region34: #{flat_food_network_forward.1} parent=1 // pred_check
      _
    $region35: #{flat_food_network_forward.1} parent=1 // pred_check_branch
      %69 = sbr.rel (0) target = $region37
    $region36: #{flat_food_network_forward.1} parent=1 // pred_region
      _
    $region37: #{flat_food_network_forward.1} parent=1 // pred_fallthru
      _
    // Predicated region
    $region38: #{flat_food_network_forward.1} parent=1 // pred_check
      _
    $region39: #{flat_food_network_forward.1} parent=1 // pred_check_branch
      %71 = sbr.rel (0) target = $region41
    $region40: #{flat_food_network_forward.1} parent=1 // pred_region
      %73 = vsyncadd [#allocation8], 0
      %s74 = sshll.u32 %s9, 4
      %s75 = int_to_ptr.hbm [resolvable:$true] %s74
      %s76 = sshll.u32 [#allocation7], 4
      %s77 = int_to_ptr.vmem [resolvable:$true] %s76
      %82 = dma.hbm_to_vmem [thread:$0]  %s75, 2048, %s77, [#allocation8], 128, 128, 8
    $region41: #{flat_food_network_forward.1} parent=1 // pred_fallthru
      _
    // Predicated region
    $region42: #{flat_food_network_forward.1} parent=1 // pred_check
      _
    $region43: #{flat_food_network_forward.1} parent=1 // pred_check_branch
      %84 = sbr.rel (0) target = $region45
    $region44: #{flat_food_network_forward.1} parent=1 // pred_region
      _
    $region45: #{flat_food_network_forward.1} parent=1 // pred_fallthru
      _
    // Predicated region
    $region46: #{flat_food_network_forward.1} parent=1 // pred_check
      _
    $region47: #{flat_food_network_forward.1} parent=1 // pred_check_branch
      %86 = sbr.rel (0) target = $region49
    $region48: #{flat_food_network_forward.1} parent=1 // pred_region
      %88 = dma.done [#allocation3], 15744
    $region49: #{flat_food_network_forward.1} parent=1 // pred_fallthru
      _
    // Predicated region
    $region50: #{flat_food_network_forward.1} parent=1 // pred_check
      _
    $region51: #{flat_food_network_forward.1} parent=1 // pred_check_branch
      %90 = sbr.rel (0) target = $region53
    $region52: #{flat_food_network_forward.1} parent=1 // pred_region
      %92 = dma.done [#allocation5], 6144
    $region53: #{flat_food_network_forward.1} parent=1 // pred_fallthru
      _
    // Predicated region
    $region54: #{flat_food_network_forward.1} parent=1 // pred_check
      _
    $region55: #{flat_food_network_forward.1} parent=1 // pred_check_branch
      %94 = sbr.rel (0) target = $region57
    $region56: #{flat_food_network_forward.1} parent=1 // pred_region
      %96 = dma.done [#allocation5], 2048
    $region57: #{flat_food_network_forward.1} parent=1 // pred_fallthru
      _
    // Predicated region
    $region58: #{flat_food_network_forward.1} parent=1 // pred_check
      _
    $region59: #{flat_food_network_forward.1} parent=1 // pred_check_branch
      %98 = sbr.rel (0) target = $region61
    $region60: #{flat_food_network_forward.1} parent=1 // pred_region
      %100 = dma.done [#allocation8], 2048
    $region61: #{flat_food_network_forward.1} parent=1 // pred_fallthru
      _
    %v101 = vld [vmem:[%s0] sm:$0xff]
    %v102 = vld [vmem:[%s0 + $0x8] sm:$0xff]
    %v103 = vld [vmem:[%s0 + $0x10] sm:$0xff]
    %v104 = vld [vmem:[#allocation2] sm:$0xff]
    %v105 = vld [vmem:[#allocation2 + $0x8] sm:$0xff]
    %v106 = vld [vmem:[#allocation2 + $0x10] sm:$0xff]
    %v107 = vld [vmem:[#allocation2 + $0x18] sm:$0xff]
    %v108 = vld [vmem:[#allocation2 + $0x20] sm:$0xff]
    %v109 = vld [vmem:[#allocation2 + $0x28] sm:$0xff]
    %v110 = vld [vmem:[#allocation2 + $0x30] sm:$0xff]
    %v111 = vld [vmem:[#allocation2 + $0x38] sm:$0xff]
    %v112 = vld [vmem:[#allocation2 + $0x40] sm:$0xff]
    %v113 = vld [vmem:[#allocation2 + $0x48] sm:$0xff]
    %v114 = vld [vmem:[#allocation2 + $0x50] sm:$0xff]
    %v115 = vld [vmem:[#allocation2 + $0x58] sm:$0xff]
    %v116 = vld [vmem:[#allocation2 + $0x60] sm:$0xff]
    %v117 = vld [vmem:[#allocation2 + $0x68] sm:$0xff]
    %v118 = vld [vmem:[#allocation2 + $0x70] sm:$0xff]
    %v119 = vld [vmem:[#allocation2 + $0x78] sm:$0xff]
    %v120 = vld [vmem:[#allocation2 + $0x80] sm:$0xff]
    %v121 = vld [vmem:[#allocation2 + $0x88] sm:$0xff]
    %v122 = vld [vmem:[#allocation2 + $0x90] sm:$0xff]
    %v123 = vld [vmem:[#allocation2 + $0x98] sm:$0xff]
    %v124 = vld [vmem:[#allocation2 + $0xa0] sm:$0xff]
    %v125 = vld [vmem:[#allocation2 + $0xa8] sm:$0xff]
    %v126 = vld [vmem:[#allocation2 + $0xb0] sm:$0xff]
    %v127 = vld [vmem:[#allocation2 + $0xb8] sm:$0xff]
    %v128 = vld [vmem:[#allocation2 + $0xc0] sm:$0xff]
    %v129 = vld [vmem:[#allocation2 + $0xc8] sm:$0xff]
    %v130 = vld [vmem:[#allocation2 + $0xd0] sm:$0xff]
    %v131 = vld [vmem:[#allocation2 + $0xd8] sm:$0xff]
    %v132 = vld [vmem:[#allocation2 + $0xe0] sm:$0xff]
    %v133 = vld [vmem:[#allocation2 + $0xe8] sm:$0xff]
    %v134 = vld [vmem:[#allocation2 + $0xf0] sm:$0xff]
    %v135 = vld [vmem:[#allocation2 + $0xf8] sm:$0xff]
    %v136 = vld [vmem:[#allocation2 + $0x100] sm:$0xff]
    %v137 = vld [vmem:[#allocation2 + $0x108] sm:$0xff]
    %v138 = vld [vmem:[#allocation2 + $0x110] sm:$0xff]
    %v139 = vld [vmem:[#allocation2 + $0x118] sm:$0xff]
    %v140 = vld [vmem:[#allocation2 + $0x120] sm:$0xff]
    %v141 = vld [vmem:[#allocation2 + $0x128] sm:$0xff]
    %v142 = vld [vmem:[#allocation2 + $0x130] sm:$0xff]
    %v143 = vld [vmem:[#allocation2 + $0x138] sm:$0xff]
    %v144 = vld [vmem:[#allocation2 + $0x140] sm:$0xff]
    %v145 = vld [vmem:[#allocation2 + $0x148] sm:$0xff]
    %v146 = vld [vmem:[#allocation2 + $0x150] sm:$0xff]
    %v147 = vld [vmem:[#allocation2 + $0x158] sm:$0xff]
    %v148 = vld [vmem:[#allocation2 + $0x160] sm:$0xff]
    %v149 = vld [vmem:[#allocation2 + $0x168] sm:$0xff]
    %v150 = vld [vmem:[#allocation2 + $0x170] sm:$0xff]
    %v151 = vld [vmem:[#allocation2 + $0x178] sm:$0xff]
    %v152 = vld [vmem:[#allocation2 + $0x180] sm:$0xff]
    %v153 = vld [vmem:[#allocation2 + $0x188] sm:$0xff]
    %v154 = vld [vmem:[#allocation2 + $0x190] sm:$0xff]
    %v155 = vld [vmem:[#allocation2 + $0x198] sm:$0xff]
    %v156 = vld [vmem:[#allocation2 + $0x1a0] sm:$0xff]
    %v157 = vld [vmem:[#allocation2 + $0x1a8] sm:$0xff]
    %v158 = vld [vmem:[#allocation2 + $0x1b0] sm:$0xff]
    %v159 = vld [vmem:[#allocation2 + $0x1b8] sm:$0xff]
    %v160 = vld [vmem:[#allocation2 + $0x1c0] sm:$0xff]
    %v161 = vld [vmem:[#allocation2 + $0x1c8] sm:$0xff]
    %v162 = vld [vmem:[#allocation2 + $0x1d0] sm:$0xff]
    %v163 = vld [vmem:[#allocation2 + $0x1d8] sm:$0xff]
    %v164 = vld [vmem:[#allocation2 + $0x1e0] sm:$0xff]
    %v165 = vld [vmem:[#allocation2 + $0x1e8] sm:$0xff]
    %v166 = vld [vmem:[#allocation2 + $0x1f0] sm:$0xff]
    %v167 = vld [vmem:[#allocation2 + $0x1f8] sm:$0xff]
    %v168 = vld [vmem:[#allocation2 + $0x200] sm:$0xff]
    %v169 = vld [vmem:[#allocation2 + $0x208] sm:$0xff]
    %v170 = vld [vmem:[#allocation2 + $0x210] sm:$0xff]
    %v171 = vld [vmem:[#allocation2 + $0x218] sm:$0xff]
    %v172 = vld [vmem:[#allocation2 + $0x220] sm:$0xff]
    %v173 = vld [vmem:[#allocation2 + $0x228] sm:$0xff]
    %v174 = vld [vmem:[#allocation2 + $0x230] sm:$0xff]
    %v175 = vld [vmem:[#allocation2 + $0x238] sm:$0xff]
    %v176 = vld [vmem:[#allocation2 + $0x240] sm:$0xff]
    %v177 = vld [vmem:[#allocation2 + $0x248] sm:$0xff]
    %v178 = vld [vmem:[#allocation2 + $0x250] sm:$0xff]
    %v179 = vld [vmem:[#allocation2 + $0x258] sm:$0xff]
    %v180 = vld [vmem:[#allocation2 + $0x260] sm:$0xff]
    %v181 = vld [vmem:[#allocation2 + $0x268] sm:$0xff]
    %v182 = vld [vmem:[#allocation2 + $0x270] sm:$0xff]
    %v183 = vld [vmem:[#allocation2 + $0x278] sm:$0xff]
    %v184 = vld [vmem:[#allocation2 + $0x280] sm:$0xff]
    %v185 = vld [vmem:[#allocation2 + $0x288] sm:$0xff]
    %v186 = vld [vmem:[#allocation2 + $0x290] sm:$0xff]
    %v187 = vld [vmem:[#allocation2 + $0x298] sm:$0xff]
    %v188 = vld [vmem:[#allocation2 + $0x2a0] sm:$0xff]
    %v189 = vld [vmem:[#allocation2 + $0x2a8] sm:$0xff]
    %v190 = vld [vmem:[#allocation2 + $0x2b0] sm:$0xff]
    %v191 = vld [vmem:[#allocation2 + $0x2b8] sm:$0xff]
    %v192 = vld [vmem:[#allocation2 + $0x2c0] sm:$0xff]
    %v193 = vld [vmem:[#allocation2 + $0x2c8] sm:$0xff]
    %v194 = vld [vmem:[#allocation2 + $0x2d0] sm:$0xff]
    %v195 = vld [vmem:[#allocation2 + $0x2d8] sm:$0xff]
    %v196 = vld [vmem:[#allocation2 + $0x2e0] sm:$0xff]
    %v197 = vld [vmem:[#allocation2 + $0x2e8] sm:$0xff]
    %v198 = vld [vmem:[#allocation2 + $0x2f0] sm:$0xff]
    %v199 = vld [vmem:[#allocation2 + $0x2f8] sm:$0xff]
    %v200 = vld [vmem:[#allocation2 + $0x300] sm:$0xff]
    %v201 = vld [vmem:[#allocation2 + $0x308] sm:$0xff]
    %v202 = vld [vmem:[#allocation2 + $0x310] sm:$0xff]
    %v203 = vld [vmem:[#allocation2 + $0x318] sm:$0xff]
    %v204 = vld [vmem:[#allocation2 + $0x320] sm:$0xff]
    %v205 = vld [vmem:[#allocation2 + $0x328] sm:$0xff]
    %v206 = vld [vmem:[#allocation2 + $0x330] sm:$0xff]
    %v207 = vld [vmem:[#allocation2 + $0x338] sm:$0xff]
    %v208 = vld [vmem:[#allocation2 + $0x340] sm:$0xff]
    %v209 = vld [vmem:[#allocation2 + $0x348] sm:$0xff]
    %v210 = vld [vmem:[#allocation2 + $0x350] sm:$0xff]
    %v211 = vld [vmem:[#allocation2 + $0x358] sm:$0xff]
    %v212 = vld [vmem:[#allocation2 + $0x360] sm:$0xff]
    %v213 = vld [vmem:[#allocation2 + $0x368] sm:$0xff]
    %v214 = vld [vmem:[#allocation2 + $0x370] sm:$0xff]
    %v215 = vld [vmem:[#allocation2 + $0x378] sm:$0xff]
    %v216 = vld [vmem:[#allocation2 + $0x380] sm:$0xff]
    %v217 = vld [vmem:[#allocation2 + $0x388] sm:$0xff]
    %v218 = vld [vmem:[#allocation2 + $0x390] sm:$0xff]
    %v219 = vld [vmem:[#allocation2 + $0x398] sm:$0xff]
    %v220 = vld [vmem:[#allocation2 + $0x3a0] sm:$0xff]
    %v221 = vld [vmem:[#allocation2 + $0x3a8] sm:$0xff]
    %v222 = vld [vmem:[#allocation2 + $0x3b0] sm:$0xff]
    %v223 = vld [vmem:[#allocation2 + $0x3b8] sm:$0xff]
    %v224 = vld [vmem:[#allocation2 + $0x3c0] sm:$0x1]
    %v225 = vld [vmem:[#allocation2 + $0x3c8] sm:$0x1]
    %v226 = vld [vmem:[#allocation2 + $0x3d0] sm:$0x1]
    %v227 = vld [vmem:[%s3] sm:$0x7]
    %v229 = vperm.slane %v227, 0
    %v230 = vperm.slane %v227, 1
    %v231 = vperm.slane %v227, 2
    %vm235 = vcmask 531456
    %v237 = vsel %vm235, %v103, 0
    %vm239 = vcmask 1040384
    %v241 = vsel %vm239, %v224, 0
    %v244 = vsel %vm239, %v225, 0
    %v247 = vsel %vm239, %v226, 0
    %249 = vmatpush.msra.mxu0 %v149
    %250 = vmatpush.msra.mxu0 %v146
    %251 = vmatpush.msra.mxu0 %v143
    %252 = vmatpush.msra.mxu0 %v140
    %253 = vmatpush.msra.mxu0 %v137
    %254 = vmatpush.msra.mxu0 %v134
    %255 = vmatpush.msra.mxu0 %v131
    %256 = vmatpush.msra.mxu0 %v128
    %257 = vmatpush.msra.mxu0 %v125
    %258 = vmatpush.msra.mxu0 %v122
    %259 = vmatpush.msra.mxu0 %v119
    %260 = vmatpush.msra.mxu0 %v116
    %261 = vmatpush.msra.mxu0 %v113
    %262 = vmatpush.msra.mxu0 %v110
    %263 = vmatpush.msra.mxu0 %v107
    %264 = vmatpush.msra.mxu0 %v104
    %265 = vmatmul.f32.gmra.mxu0 %v101
    %v266 = vpop.f32.mrf.mxu0
    %v267 = vadd.f32 %v229, %v266
    %268 = vdwg.mxu0
    %269 = vmatpush.msra.mxu0 %v197
    %270 = vmatpush.msra.mxu0 %v194
    %271 = vmatpush.msra.mxu0 %v191
    %272 = vmatpush.msra.mxu0 %v188
    %273 = vmatpush.msra.mxu0 %v185
    %274 = vmatpush.msra.mxu0 %v182
    %275 = vmatpush.msra.mxu0 %v179
    %276 = vmatpush.msra.mxu0 %v176
    %277 = vmatpush.msra.mxu0 %v173
    %278 = vmatpush.msra.mxu0 %v170
    %279 = vmatpush.msra.mxu0 %v167
    %280 = vmatpush.msra.mxu0 %v164
    %281 = vmatpush.msra.mxu0 %v161
    %282 = vmatpush.msra.mxu0 %v158
    %283 = vmatpush.msra.mxu0 %v155
    %284 = vmatpush.msra.mxu0 %v152
    %285 = vmatmul.f32.gmra.mxu0 %v102
    %v286 = vpop.f32.mrf.mxu0
    %v287 = vadd.f32 %v267, %v286
    %288 = vdwg.mxu0
    %289 = vmatpush.msra.mxu0 0.0
    %290 = vmatpush.msra.mxu0 0.0
    %291 = vmatpush.msra.mxu0 0.0
    %292 = vmatpush.msra.mxu0 0.0
    %293 = vmatpush.msra.mxu0 0.0
    %294 = vmatpush.msra.mxu0 0.0
    %295 = vmatpush.msra.mxu0 0.0
    %296 = vmatpush.msra.mxu0 %v241
    %297 = vmatpush.msra.mxu0 %v221
    %298 = vmatpush.msra.mxu0 %v218
    %299 = vmatpush.msra.mxu0 %v215
    %300 = vmatpush.msra.mxu0 %v212
    %301 = vmatpush.msra.mxu0 %v209
    %302 = vmatpush.msra.mxu0 %v206
    %303 = vmatpush.msra.mxu0 %v203
    %304 = vmatpush.msra.mxu0 %v200
    %305 = vmatmul.f32.gmra.mxu0 %v237
    %v306 = vpop.f32.mrf.mxu0
    %v307 = vadd.f32 %v287, %v306
    %308 = vdwg.mxu0
    %309 = vmatpush.msra.mxu0 %v150
    %310 = vmatpush.msra.mxu0 %v147
    %311 = vmatpush.msra.mxu0 %v144
    %312 = vmatpush.msra.mxu0 %v141
    %313 = vmatpush.msra.mxu0 %v138
    %314 = vmatpush.msra.mxu0 %v135
    %315 = vmatpush.msra.mxu0 %v132
    %316 = vmatpush.msra.mxu0 %v129
    %317 = vmatpush.msra.mxu0 %v126
    %318 = vmatpush.msra.mxu0 %v123
    %319 = vmatpush.msra.mxu0 %v120
    %320 = vmatpush.msra.mxu0 %v117
    %321 = vmatpush.msra.mxu0 %v114
    %322 = vmatpush.msra.mxu0 %v111
    %323 = vmatpush.msra.mxu0 %v108
    %324 = vmatpush.msra.mxu0 %v105
    %325 = vmatmul.f32.gmra.mxu0 %v101
    %v326 = vpop.f32.mrf.mxu0
    %v327 = vadd.f32 %v230, %v326
    %328 = vdwg.mxu0
    %329 = vmatpush.msra.mxu0 %v198
    %330 = vmatpush.msra.mxu0 %v195
    %331 = vmatpush.msra.mxu0 %v192
    %332 = vmatpush.msra.mxu0 %v189
    %333 = vmatpush.msra.mxu0 %v186
    %334 = vmatpush.msra.mxu0 %v183
    %335 = vmatpush.msra.mxu0 %v180
    %336 = vmatpush.msra.mxu0 %v177
    %337 = vmatpush.msra.mxu0 %v174
    %338 = vmatpush.msra.mxu0 %v171
    %339 = vmatpush.msra.mxu0 %v168
    %340 = vmatpush.msra.mxu0 %v165
    %341 = vmatpush.msra.mxu0 %v162
    %342 = vmatpush.msra.mxu0 %v159
    %343 = vmatpush.msra.mxu0 %v156
    %344 = vmatpush.msra.mxu0 %v153
    %345 = vmatmul.f32.gmra.mxu0 %v102
    %v346 = vpop.f32.mrf.mxu0
    %v347 = vadd.f32 %v327, %v346
    %348 = vdwg.mxu0
    %349 = vmatpush.msra.mxu0 0.0
    %350 = vmatpush.msra.mxu0 0.0
    %351 = vmatpush.msra.mxu0 0.0
    %352 = vmatpush.msra.mxu0 0.0
    %353 = vmatpush.msra.mxu0 0.0
    %354 = vmatpush.msra.mxu0 0.0
    %355 = vmatpush.msra.mxu0 0.0
    %356 = vmatpush.msra.mxu0 %v244
    %357 = vmatpush.msra.mxu0 %v222
    %358 = vmatpush.msra.mxu0 %v219
    %359 = vmatpush.msra.mxu0 %v216
    %360 = vmatpush.msra.mxu0 %v213
    %361 = vmatpush.msra.mxu0 %v210
    %362 = vmatpush.msra.mxu0 %v207
    %363 = vmatpush.msra.mxu0 %v204
    %364 = vmatpush.msra.mxu0 %v201
    %365 = vmatmul.f32.gmra.mxu0 %v237
    %v366 = vpop.f32.mrf.mxu0
    %v367 = vadd.f32 %v347, %v366
    %368 = vdwg.mxu0
    %369 = vmatpush.msra.mxu0 %v151
    %370 = vmatpush.msra.mxu0 %v148
    %371 = vmatpush.msra.mxu0 %v145
    %372 = vmatpush.msra.mxu0 %v142
    %373 = vmatpush.msra.mxu0 %v139
    %374 = vmatpush.msra.mxu0 %v136
    %375 = vmatpush.msra.mxu0 %v133
    %376 = vmatpush.msra.mxu0 %v130
    %377 = vmatpush.msra.mxu0 %v127
    %378 = vmatpush.msra.mxu0 %v124
    %379 = vmatpush.msra.mxu0 %v121
    %380 = vmatpush.msra.mxu0 %v118
    %381 = vmatpush.msra.mxu0 %v115
    %382 = vmatpush.msra.mxu0 %v112
    %383 = vmatpush.msra.mxu0 %v109
    %384 = vmatpush.msra.mxu0 %v106
    %385 = vmatmul.f32.gmra.mxu0 %v101
    %v386 = vpop.f32.mrf.mxu0
    %v387 = vadd.f32 %v231, %v386
    %388 = vdwg.mxu0
    %389 = vmatpush.msra.mxu0 %v199
    %390 = vmatpush.msra.mxu0 %v196
    %391 = vmatpush.msra.mxu0 %v193
    %392 = vmatpush.msra.mxu0 %v190
    %393 = vmatpush.msra.mxu0 %v187
    %394 = vmatpush.msra.mxu0 %v184
    %395 = vmatpush.msra.mxu0 %v181
    %396 = vmatpush.msra.mxu0 %v178
    %397 = vmatpush.msra.mxu0 %v175
    %398 = vmatpush.msra.mxu0 %v172
    %399 = vmatpush.msra.mxu0 %v169
    %400 = vmatpush.msra.mxu0 %v166
    %401 = vmatpush.msra.mxu0 %v163
    %402 = vmatpush.msra.mxu0 %v160
    %403 = vmatpush.msra.mxu0 %v157
    %404 = vmatpush.msra.mxu0 %v154
    %405 = vmatmul.f32.gmra.mxu0 %v102
    %v406 = vpop.f32.mrf.mxu0
    %v407 = vadd.f32 %v387, %v406
    %408 = vdwg.mxu0
    %409 = vmatpush.msra.mxu0 0.0
    %410 = vmatpush.msra.mxu0 0.0
    %411 = vmatpush.msra.mxu0 0.0
    %412 = vmatpush.msra.mxu0 0.0
    %413 = vmatpush.msra.mxu0 0.0
    %414 = vmatpush.msra.mxu0 0.0
    %415 = vmatpush.msra.mxu0 0.0
    %416 = vmatpush.msra.mxu0 %v247
    %417 = vmatpush.msra.mxu0 %v223
    %418 = vmatpush.msra.mxu0 %v220
    %419 = vmatpush.msra.mxu0 %v217
    %420 = vmatpush.msra.mxu0 %v214
    %421 = vmatpush.msra.mxu0 %v211
    %422 = vmatpush.msra.mxu0 %v208
    %423 = vmatpush.msra.mxu0 %v205
    %424 = vmatpush.msra.mxu0 %v202
    %425 = vmatmul.f32.gmra.mxu0 %v237
    %v426 = vpop.f32.mrf.mxu0
    %v427 = vadd.f32 %v407, %v426
    %428 = vdwg.mxu0
    %v429 = vmax.f32 %v307, 0.0
    %v430 = vmax.f32 %v367, 0.0
    %v431 = vmax.f32 %v427, 0.0
    %v432 = vld [vmem:[%s1] sm:$0xff]
    %v433 = vld [vmem:[#allocation4] sm:$0xff]
    %v434 = vld [vmem:[#allocation4 + $0x8] sm:$0xff]
    %v435 = vld [vmem:[#allocation4 + $0x10] sm:$0xff]
    %v436 = vld [vmem:[#allocation4 + $0x18] sm:$0xff]
    %v437 = vld [vmem:[#allocation4 + $0x20] sm:$0xff]
    %v438 = vld [vmem:[#allocation4 + $0x28] sm:$0xff]
    %v439 = vld [vmem:[#allocation4 + $0x30] sm:$0xff]
    %v440 = vld [vmem:[#allocation4 + $0x38] sm:$0xff]
    %v441 = vld [vmem:[#allocation4 + $0x40] sm:$0xff]
    %v442 = vld [vmem:[#allocation4 + $0x48] sm:$0xff]
    %v443 = vld [vmem:[#allocation4 + $0x50] sm:$0xff]
    %v444 = vld [vmem:[#allocation4 + $0x58] sm:$0xff]
    %v445 = vld [vmem:[#allocation4 + $0x60] sm:$0xff]
    %v446 = vld [vmem:[#allocation4 + $0x68] sm:$0xff]
    %v447 = vld [vmem:[#allocation4 + $0x70] sm:$0xff]
    %v448 = vld [vmem:[#allocation4 + $0x78] sm:$0xff]
    %v449 = vld [vmem:[#allocation4 + $0x80] sm:$0xff]
    %v450 = vld [vmem:[#allocation4 + $0x88] sm:$0xff]
    %v451 = vld [vmem:[#allocation4 + $0x90] sm:$0xff]
    %v452 = vld [vmem:[#allocation4 + $0x98] sm:$0xff]
    %v453 = vld [vmem:[#allocation4 + $0xa0] sm:$0xff]
    %v454 = vld [vmem:[#allocation4 + $0xa8] sm:$0xff]
    %v455 = vld [vmem:[#allocation4 + $0xb0] sm:$0xff]
    %v456 = vld [vmem:[#allocation4 + $0xb8] sm:$0xff]
    %v457 = vld [vmem:[#allocation4 + $0xc0] sm:$0xff]
    %v458 = vld [vmem:[#allocation4 + $0xc8] sm:$0xff]
    %v459 = vld [vmem:[#allocation4 + $0xd0] sm:$0xff]
    %v460 = vld [vmem:[#allocation4 + $0xd8] sm:$0xff]
    %v461 = vld [vmem:[#allocation4 + $0xe0] sm:$0xff]
    %v462 = vld [vmem:[#allocation4 + $0xe8] sm:$0xff]
    %v463 = vld [vmem:[#allocation4 + $0xf0] sm:$0xff]
    %v464 = vld [vmem:[#allocation4 + $0xf8] sm:$0xff]
    %v465 = vld [vmem:[#allocation4 + $0x100] sm:$0xff]
    %v466 = vld [vmem:[#allocation4 + $0x108] sm:$0xff]
    %v467 = vld [vmem:[#allocation4 + $0x110] sm:$0xff]
    %v468 = vld [vmem:[#allocation4 + $0x118] sm:$0xff]
    %v469 = vld [vmem:[#allocation4 + $0x120] sm:$0xff]
    %v470 = vld [vmem:[#allocation4 + $0x128] sm:$0xff]
    %v471 = vld [vmem:[#allocation4 + $0x130] sm:$0xff]
    %v472 = vld [vmem:[#allocation4 + $0x138] sm:$0xff]
    %v473 = vld [vmem:[#allocation4 + $0x140] sm:$0xff]
    %v474 = vld [vmem:[#allocation4 + $0x148] sm:$0xff]
    %v475 = vld [vmem:[#allocation4 + $0x150] sm:$0xff]
    %v476 = vld [vmem:[#allocation4 + $0x158] sm:$0xff]
    %v477 = vld [vmem:[#allocation4 + $0x160] sm:$0xff]
    %v478 = vld [vmem:[#allocation4 + $0x168] sm:$0xff]
    %v479 = vld [vmem:[#allocation4 + $0x170] sm:$0xff]
    %v480 = vld [vmem:[#allocation4 + $0x178] sm:$0xff]
    %v481 = vld [vmem:[%s5] sm:$0x1]
    %483 = vset.pattern.permute.xlu0 0
    %484 = vperm.xlu0 %483, %v432
    %v485 = vpop.permute.xlu0 %484
    %v488 = vperm.slane %v481, 0
    %v490 = vmul.f32 %v485, %v488
    %491 = vmatpush.msra.mxu0 %v448
    %492 = vmatpush.msra.mxu0 %v447
    %493 = vmatpush.msra.mxu0 %v446
    %494 = vmatpush.msra.mxu0 %v445
    %495 = vmatpush.msra.mxu0 %v444
    %496 = vmatpush.msra.mxu0 %v443
    %497 = vmatpush.msra.mxu0 %v442
    %498 = vmatpush.msra.mxu0 %v441
    %499 = vmatpush.msra.mxu0 %v440
    %500 = vmatpush.msra.mxu0 %v439
    %501 = vmatpush.msra.mxu0 %v438
    %502 = vmatpush.msra.mxu0 %v437
    %503 = vmatpush.msra.mxu0 %v436
    %504 = vmatpush.msra.mxu0 %v435
    %505 = vmatpush.msra.mxu0 %v434
    %506 = vmatpush.msra.mxu0 %v433
    %507 = vmatmul.f32.gmra.mxu0 %v429
    %v508 = vpop.f32.mrf.mxu0
    %v509 = vadd.f32 %v490, %v508
    %510 = vdwg.mxu0
    %511 = vmatpush.msra.mxu0 %v464
    %512 = vmatpush.msra.mxu0 %v463
    %513 = vmatpush.msra.mxu0 %v462
    %514 = vmatpush.msra.mxu0 %v461
    %515 = vmatpush.msra.mxu0 %v460
    %516 = vmatpush.msra.mxu0 %v459
    %517 = vmatpush.msra.mxu0 %v458
    %518 = vmatpush.msra.mxu0 %v457
    %519 = vmatpush.msra.mxu0 %v456
    %520 = vmatpush.msra.mxu0 %v455
    %521 = vmatpush.msra.mxu0 %v454
    %522 = vmatpush.msra.mxu0 %v453
    %523 = vmatpush.msra.mxu0 %v452
    %524 = vmatpush.msra.mxu0 %v451
    %525 = vmatpush.msra.mxu0 %v450
    %526 = vmatpush.msra.mxu0 %v449
    %527 = vmatmul.f32.gmra.mxu0 %v430
    %v528 = vpop.f32.mrf.mxu0
    %v529 = vadd.f32 %v509, %v528
    %530 = vdwg.mxu0
    %531 = vmatpush.msra.mxu0 %v480
    %532 = vmatpush.msra.mxu0 %v479
    %533 = vmatpush.msra.mxu0 %v478
    %534 = vmatpush.msra.mxu0 %v477
    %535 = vmatpush.msra.mxu0 %v476
    %536 = vmatpush.msra.mxu0 %v475
    %537 = vmatpush.msra.mxu0 %v474
    %538 = vmatpush.msra.mxu0 %v473
    %539 = vmatpush.msra.mxu0 %v472
    %540 = vmatpush.msra.mxu0 %v471
    %541 = vmatpush.msra.mxu0 %v470
    %542 = vmatpush.msra.mxu0 %v469
    %543 = vmatpush.msra.mxu0 %v468
    %544 = vmatpush.msra.mxu0 %v467
    %545 = vmatpush.msra.mxu0 %v466
    %546 = vmatpush.msra.mxu0 %v465
    %547 = vmatmul.f32.gmra.mxu0 %v431
    %v548 = vpop.f32.mrf.mxu0
    %v549 = vadd.f32 %v529, %v548
    %550 = vdwg.mxu0
    %v551 = vld [vmem:[%s6] sm:$0x1]
    %v553 = vperm.slane %v551, 0
    %v555 = vadd.f32 %v549, %v553
    %v556 = vmax.f32 %v555, 0.0
    %v557 = vld [vmem:[#allocation6] sm:$0xff]
    %v558 = vld [vmem:[#allocation6 + $0x8] sm:$0xff]
    %v559 = vld [vmem:[#allocation6 + $0x10] sm:$0xff]
    %v560 = vld [vmem:[#allocation6 + $0x18] sm:$0xff]
    %v561 = vld [vmem:[#allocation6 + $0x20] sm:$0xff]
    %v562 = vld [vmem:[#allocation6 + $0x28] sm:$0xff]
    %v563 = vld [vmem:[#allocation6 + $0x30] sm:$0xff]
    %v564 = vld [vmem:[#allocation6 + $0x38] sm:$0xff]
    %v565 = vld [vmem:[#allocation6 + $0x40] sm:$0xff]
    %v566 = vld [vmem:[#allocation6 + $0x48] sm:$0xff]
    %v567 = vld [vmem:[#allocation6 + $0x50] sm:$0xff]
    %v568 = vld [vmem:[#allocation6 + $0x58] sm:$0xff]
    %v569 = vld [vmem:[#allocation6 + $0x60] sm:$0xff]
    %v570 = vld [vmem:[#allocation6 + $0x68] sm:$0xff]
    %v571 = vld [vmem:[#allocation6 + $0x70] sm:$0xff]
    %v572 = vld [vmem:[#allocation6 + $0x78] sm:$0xff]
    %v573 = vld [vmem:[%s8] sm:$0x1]
    %v575 = vperm.slane %v573, 0
    %577 = vmatpush.msra.mxu0 %v572
    %578 = vmatpush.msra.mxu0 %v571
    %579 = vmatpush.msra.mxu0 %v570
    %580 = vmatpush.msra.mxu0 %v569
    %581 = vmatpush.msra.mxu0 %v568
    %582 = vmatpush.msra.mxu0 %v567
    %583 = vmatpush.msra.mxu0 %v566
    %584 = vmatpush.msra.mxu0 %v565
    %585 = vmatpush.msra.mxu0 %v564
    %586 = vmatpush.msra.mxu0 %v563
    %587 = vmatpush.msra.mxu0 %v562
    %588 = vmatpush.msra.mxu0 %v561
    %589 = vmatpush.msra.mxu0 %v560
    %590 = vmatpush.msra.mxu0 %v559
    %591 = vmatpush.msra.mxu0 %v558
    %592 = vmatpush.msra.mxu0 %v557
    %593 = vmatmul.f32.gmra.mxu0 %v556
    %v594 = vpop.f32.mrf.mxu0
    %v595 = vadd.f32 %v575, %v594
    %596 = vdwg.mxu0
    %v597 = vmax.f32 %v595, 0.0
    %v598 = vld [vmem:[#allocation7] sm:$0xff]
    %v599 = vld [vmem:[#allocation7 + $0x8] sm:$0xff]
    %v600 = vld [vmem:[#allocation7 + $0x10] sm:$0xff]
    %v601 = vld [vmem:[#allocation7 + $0x18] sm:$0xff]
    %v602 = vld [vmem:[#allocation7 + $0x20] sm:$0xff]
    %v603 = vld [vmem:[#allocation7 + $0x28] sm:$0xff]
    %v604 = vld [vmem:[#allocation7 + $0x30] sm:$0xff]
    %v605 = vld [vmem:[#allocation7 + $0x38] sm:$0xff]
    %v606 = vld [vmem:[#allocation7 + $0x40] sm:$0xff]
    %v607 = vld [vmem:[#allocation7 + $0x48] sm:$0xff]
    %v608 = vld [vmem:[#allocation7 + $0x50] sm:$0xff]
    %v609 = vld [vmem:[#allocation7 + $0x58] sm:$0xff]
    %v610 = vld [vmem:[#allocation7 + $0x60] sm:$0xff]
    %v611 = vld [vmem:[#allocation7 + $0x68] sm:$0xff]
    %v612 = vld [vmem:[#allocation7 + $0x70] sm:$0xff]
    %v613 = vld [vmem:[#allocation7 + $0x78] sm:$0xff]
    %v614 = vld [vmem:[%s10] sm:$0x1]
    %v616 = vperm.slane %v614, 0
    %618 = vmatpush.msra.mxu0 %v613
    %619 = vmatpush.msra.mxu0 %v612
    %620 = vmatpush.msra.mxu0 %v611
    %621 = vmatpush.msra.mxu0 %v610
    %622 = vmatpush.msra.mxu0 %v609
    %623 = vmatpush.msra.mxu0 %v608
    %624 = vmatpush.msra.mxu0 %v607
    %625 = vmatpush.msra.mxu0 %v606
    %626 = vmatpush.msra.mxu0 %v605
    %627 = vmatpush.msra.mxu0 %v604
    %628 = vmatpush.msra.mxu0 %v603
    %629 = vmatpush.msra.mxu0 %v602
    %630 = vmatpush.msra.mxu0 %v601
    %631 = vmatpush.msra.mxu0 %v600
    %632 = vmatpush.msra.mxu0 %v599
    %633 = vmatpush.msra.mxu0 %v598
    %634 = vmatmul.f32.gmra.mxu0 %v597
    %v635 = vpop.f32.mrf.mxu0
    %v636 = vadd.f32 %v616, %v635
    %637 = vdwg.mxu0
    %638 = vmax.xlane.f32.xlu0 %v636
    %v639 = vpop.xlane.xlu0 %638
    %v640 = vsub.f32 %v636, %v639
    %v641 = vmul.f32 %v640, 1.442695
    %v642 = vpow.pop %v641
    %643 = vadd.xlane.f32.xlu0 %v642
    %v644 = vpop.xlane.xlu0 %643
    %v645 = vrcp.pop %v644
    %v646 = vmul.f32 %v644, %v645
    %v647 = vsub.f32 2.0, %v646
    %v648 = vmul.f32 %v645, %v647
    %v649 = vmul.f32 %v642, %v648
    %650 = vst [vmem:[%s11] sm:$0xff] %v649
    // Predicated region
    $region62: #{flat_food_network_forward.1} parent=1 // pred_check
      _
    $region63: #{flat_food_network_forward.1} parent=1 // pred_check_branch
      %652 = sbr.rel (0) target = $region65
    $region64: #{flat_food_network_forward.1} parent=1 // pred_region
      _
    $region65: #{flat_food_network_forward.1} parent=1 // pred_fallthru
      _
    // Predicated region
    $region66: #{flat_food_network_forward.1} parent=1 // pred_check
      _
    $region67: #{flat_food_network_forward.1} parent=1 // pred_check_branch
      %654 = sbr.rel (0) target = $region69
    $region68: #{flat_food_network_forward.1} parent=1 // pred_region
      _
    $region69: #{flat_food_network_forward.1} parent=1 // pred_fallthru
      _
    %655 = vsyncpa [#allocation3], 1
    %656 = vsyncpa [#allocation5], 1
    %657 = vsyncpa [#allocation8], 1

</llo_original>
